<compile_context>
chip_gen: v5e
topology: v5e:2x2
jax: 0.10.0
libtpu: 0.0.40
codegen_flags: <defaults>
</compile_context>

<pallas_src>
import functools

import jax
import jax.numpy as jnp
from jax.experimental import pallas as pl
from jax.experimental.pallas import tpu as pltpu


def _choose_tile_hw(hw, c, budget_bytes=12 * 1024 * 1024):
    """Largest lane-dense tile along HW such that
    2 inputs x 2 pipeline buffers x C x tile x 4B <= budget_bytes."""
    budget_elems = max(128, budget_bytes // (16 * c))
    tile = max(128, (budget_elems // 128) * 128)
    if tile >= hw:
        return hw  # single block covering the full (possibly unaligned) dim
    return tile


def _dice_sums_kernel(x_ref, y_ref, tp_ref, sxy_ref, *,
                      hw, tile_hw, k_blocks, split_axis):
    # x_ref / y_ref: (1, C, tile_hw) tile of the (N, C, H*W) inputs.
    # tp/sxy refs:   (1, C, 1) resident accumulators (one per split slice).
    @pl.when((pl.program_id(1) == 0) & (pl.program_id(2) == 0))
    def _init():
        tp_ref[...] = jnp.zeros_like(tp_ref)
        sxy_ref[...] = jnp.zeros_like(sxy_ref)

    x = x_ref[0].astype(jnp.float32)  # (C, tile_hw)
    y = y_ref[0].astype(jnp.float32)

    if hw % tile_hw != 0:
        # Mask out-of-range lanes of the (partial) last HW block.
        if split_axis == "k":
            k_glob = pl.program_id(0) * k_blocks + pl.program_id(2)
        else:
            k_glob = pl.program_id(2)
        col = jax.lax.broadcasted_iota(jnp.int32, x.shape, 1)
        valid = (k_glob * tile_hw + col) < hw
        x = jnp.where(valid, x, 0.0)
        y = jnp.where(valid, y, 0.0)

    tp_ref[0] += jnp.sum(x * y, axis=-1, keepdims=True)
    sxy_ref[0] += jnp.sum(x + y, axis=-1, keepdims=True)


def _dice_sums(x3, y3):
    """x3, y3: (N, C, HW) float arrays.

    Returns (tp, sxy), each (C,) float32, where
      tp[c]  = sum_{n,hw} x*y
      sxy[c] = sum_{n,hw} (x + y)
    """
    N, C, HW = x3.shape
    tile_hw = _choose_tile_hw(HW, C)
    num_k = pl.cdiv(HW, tile_hw)

    # Split the reduction into two independent halves so v7x's two
    # TensorCores can each stream half the data ("parallel" leading axis).
    if N % 2 == 0 and N >= 2:
        split, split_axis = 2, "n"
        n_blocks, k_blocks = N // 2, num_k
    elif num_k % 2 == 0 and num_k >= 2:
        split, split_axis = 2, "k"
        n_blocks, k_blocks = N, num_k // 2
    else:
        split, split_axis = 1, "n"
        n_blocks, k_blocks = N, num_k

    if split_axis == "n":
        def in_map(s, n, k):
            return (s * n_blocks + n, 0, k)
    else:
        def in_map(s, n, k):
            return (n, 0, s * k_blocks + k)

    kernel = functools.partial(
        _dice_sums_kernel,
        hw=HW, tile_hw=tile_hw, k_blocks=k_blocks, split_axis=split_axis)

    acc_shape = jax.ShapeDtypeStruct((split, C, 1), jnp.float32)
    acc_spec = pl.BlockSpec((1, C, 1), lambda s, n, k: (s, 0, 0))

    tp3, sxy3 = pl.pallas_call(
        kernel,
        out_shape=(acc_shape, acc_shape),
        grid_spec=pltpu.PrefetchScalarGridSpec(
            num_scalar_prefetch=0,
            grid=(split, n_blocks, k_blocks),
            in_specs=[
                pl.BlockSpec((1, C, tile_hw), in_map),
                pl.BlockSpec((1, C, tile_hw), in_map),
            ],
            out_specs=[acc_spec, acc_spec],
        ),
        compiler_params=pltpu.CompilerParams(
            dimension_semantics=("parallel", "arbitrary", "arbitrary"),
            vmem_limit_bytes=32 * 1024 * 1024,
        ),
    )(x3, y3)

    tp = jnp.sum(tp3, axis=0)[:, 0]
    sxy = jnp.sum(sxy3, axis=0)[:, 0]
    return tp, sxy


@jax.jit
def dice_loss(x, y):
    """Pallas implementation of DiceLoss.forward for NCHW inputs x, y."""
    N, C, H, W = x.shape
    # Free reshape of contiguous NCHW -> (N, C, H*W); no HBM transpose.
    x3 = x.reshape(N, C, H * W)
    y3 = y.reshape(N, C, H * W)

    tp, sxy = _dice_sums(x3, y3)

    # 2*tp + fp + fn == 2*tp + (sum(x)-tp) + (sum(y)-tp) == sum(x) + sum(y)
    nominator = 2.0 * tp + 1e-05
    denominator = sxy + 1e-05
    dice_score = -(nominator / (denominator + 1e-08))  # (C,)

    # torch.mean(torch.stack([(1/C) * dice_score[i] for i in range(C)]))
    # (divides by C twice, faithfully mirroring the PyTorch module)
    return jnp.mean((1.0 / C) * dice_score)


def _reference(x, y):
    """Pure-JAX reference mirroring the PyTorch forward exactly."""
    tp = jnp.sum(x * y, axis=(0, 2, 3))
    fp = jnp.sum(x * (1.0 - y), axis=(0, 2, 3))
    fn = jnp.sum((1.0 - x) * y, axis=(0, 2, 3))
    nominator = 2.0 * tp + 1e-05
    denominator = 2.0 * tp + fp + fn + 1e-05
    dice_score = -(nominator / (denominator + 1e-08))
    label_nc = dice_score.shape[0]
    return jnp.mean((1.0 / label_nc) * dice_score)


if __name__ == "__main__":
    key = jax.random.PRNGKey(0)

    # Primary check: standard small NCHW shape.
    kx, ky = jax.random.split(key)
    N, C, H, W = 2, 4, 16, 16
    x = jax.random.uniform(kx, (N, C, H, W), dtype=jnp.float32)
    y = jax.random.uniform(ky, (N, C, H, W), dtype=jnp.float32)
    out = jax.block_until_ready(dice_loss(x, y))
    ref = jax.block_until_ready(_reference(x, y))
    assert jnp.allclose(out, ref, rtol=1e-4, atol=1e-6), (out, ref)

    # Secondary check: odd batch / non-square spatial (exercises split=1 path).
    kx2, ky2 = jax.random.split(jax.random.PRNGKey(1))
    x2 = jax.random.uniform(kx2, (3, 2, 12, 20), dtype=jnp.float32)
    y2 = jax.random.uniform(ky2, (3, 2, 12, 20), dtype=jnp.float32)
    out2 = jax.block_until_ready(dice_loss(x2, y2))
    ref2 = jax.block_until_ready(_reference(x2, y2))
    assert jnp.allclose(out2, ref2, rtol=1e-4, atol=1e-6), (out2, ref2)

    print("KERNEL_OK")
</pallas_src>

<mosaic_0001>
module attributes {stable_mosaic.version = 11 : i64} {
  func.func @_dice_sums_kernel(%arg0: i32, %arg1: i32, %arg2: i32, %arg3: memref<1x4x256xf32, #tpu.memory_space<vmem>>, %arg4: memref<1x4x256xf32, #tpu.memory_space<vmem>>, %arg5: memref<1x4x1xf32, #tpu.memory_space<vmem>>, %arg6: memref<1x4x1xf32, #tpu.memory_space<vmem>>) attributes {dimension_semantics = [#tpu.dimension_semantics<parallel>, #tpu.dimension_semantics<arbitrary>, #tpu.dimension_semantics<arbitrary>], iteration_bounds = array<i64: 2, 1, 1>, scalar_prefetch = 0 : i64, scratch_operands = 0 : i64, tpu.core_type = #tpu.core_type<tc>, window_params = [{transform_indices = @transform_0, window_bounds = array<i64: 1, 4, 256>}, {transform_indices = @transform_1, window_bounds = array<i64: 1, 4, 256>}, {transform_indices = @transform_2, window_bounds = array<i64: 1, 4, 1>}, {transform_indices = @transform_3, window_bounds = array<i64: 1, 4, 1>}]} {
    %c0_i32 = arith.constant 0 : i32
    %0 = arith.cmpi eq, %arg1, %c0_i32 : i32
    %c0_i32_0 = arith.constant 0 : i32
    %1 = arith.cmpi eq, %arg2, %c0_i32_0 : i32
    %2 = arith.andi %0, %1 : i1
    %3 = arith.extui %2 : i1 to i32
    %c0_i32_1 = arith.constant 0 : i32
    %4 = arith.cmpi ne, %3, %c0_i32_1 : i32
    scf.if %4 {
      %cst_20 = arith.constant 0.000000e+00 : f32
      %27 = vector.broadcast %cst_20 : f32 to vector<1x4x1xf32>
      %c0_21 = arith.constant 0 : index
      %c0_22 = arith.constant 0 : index
      %c0_23 = arith.constant 0 : index
      %28 = vector.load %arg5[%c0_21, %c0_22, %c0_23] : memref<1x4x1xf32, #tpu.memory_space<vmem>>, vector<1x4x1xf32>
      tpu.vector_store %arg5[%c0_21, %c0_22, %c0_23], %27 {strides = array<i32>} : memref<1x4x1xf32, #tpu.memory_space<vmem>>, vector<1x4x1xf32>,
      %cst_24 = arith.constant 0.000000e+00 : f32
      %29 = vector.broadcast %cst_24 : f32 to vector<1x4x1xf32>
      %c0_25 = arith.constant 0 : index
      %c0_26 = arith.constant 0 : index
      %c0_27 = arith.constant 0 : index
      %30 = vector.load %arg6[%c0_25, %c0_26, %c0_27] : memref<1x4x1xf32, #tpu.memory_space<vmem>>, vector<1x4x1xf32>
      tpu.vector_store %arg6[%c0_25, %c0_26, %c0_27], %29 {strides = array<i32>} : memref<1x4x1xf32, #tpu.memory_space<vmem>>, vector<1x4x1xf32>,
    } else {
    }
    %c0 = arith.constant 0 : index
    %c0_2 = arith.constant 0 : index
    %c0_3 = arith.constant 0 : index
    %5 = vector.load %arg3[%c0, %c0_2, %c0_3] : memref<1x4x256xf32, #tpu.memory_space<vmem>>, vector<1x4x256xf32>
    %6 = vector.shape_cast %5 : vector<1x4x256xf32> to vector<4x256xf32>
    %c0_4 = arith.constant 0 : index
    %c0_5 = arith.constant 0 : index
    %c0_6 = arith.constant 0 : index
    %7 = vector.load %arg4[%c0_4, %c0_5, %c0_6] : memref<1x4x256xf32, #tpu.memory_space<vmem>>, vector<1x4x256xf32>
    %8 = vector.shape_cast %7 : vector<1x4x256xf32> to vector<4x256xf32>
    %c0_7 = arith.constant 0 : index
    %c0_8 = arith.constant 0 : index
    %c0_9 = arith.constant 0 : index
    %9 = vector.load %arg5[%c0_7, %c0_8, %c0_9] : memref<1x4x1xf32, #tpu.memory_space<vmem>>, vector<1x4x1xf32>
    %10 = vector.shape_cast %9 : vector<1x4x1xf32> to vector<4x1xf32>
    %11 = arith.mulf %6, %8 : vector<4x256xf32>
    %cst = arith.constant dense<0.000000e+00> : vector<4xf32>
    %12 = vector.multi_reduction <add>, %11, %cst [1] : vector<4x256xf32> to vector<4xf32>
    %13 = vector.shape_cast %12 : vector<4xf32> to vector<4x1xf32>
    %14 = arith.addf %10, %13 : vector<4x1xf32>
    %c0_10 = arith.constant 0 : index
    %c0_11 = arith.constant 0 : index
    %c0_12 = arith.constant 0 : index
    %15 = vector.load %arg5[%c0_10, %c0_11, %c0_12] : memref<1x4x1xf32, #tpu.memory_space<vmem>>, vector<1x4x1xf32>
    %16 = vector.shape_cast %15 : vector<1x4x1xf32> to vector<4x1xf32>
    %17 = vector.shape_cast %14 : vector<4x1xf32> to vector<1x4x1xf32>
    tpu.vector_store %arg5[%c0_10, %c0_11, %c0_12], %17 {strides = array<i32>} : memref<1x4x1xf32, #tpu.memory_space<vmem>>, vector<1x4x1xf32>,
    %c0_13 = arith.constant 0 : index
    %c0_14 = arith.constant 0 : index
    %c0_15 = arith.constant 0 : index
    %18 = vector.load %arg6[%c0_13, %c0_14, %c0_15] : memref<1x4x1xf32, #tpu.memory_space<vmem>>, vector<1x4x1xf32>
    %19 = vector.shape_cast %18 : vector<1x4x1xf32> to vector<4x1xf32>
    %20 = arith.addf %6, %8 : vector<4x256xf32>
    %cst_16 = arith.constant dense<0.000000e+00> : vector<4xf32>
    %21 = vector.multi_reduction <add>, %20, %cst_16 [1] : vector<4x256xf32> to vector<4xf32>
    %22 = vector.shape_cast %21 : vector<4xf32> to vector<4x1xf32>
    %23 = arith.addf %19, %22 : vector<4x1xf32>
    %c0_17 = arith.constant 0 : index
    %c0_18 = arith.constant 0 : index
    %c0_19 = arith.constant 0 : index
    %24 = vector.load %arg6[%c0_17, %c0_18, %c0_19] : memref<1x4x1xf32, #tpu.memory_space<vmem>>, vector<1x4x1xf32>
    %25 = vector.shape_cast %24 : vector<1x4x1xf32> to vector<4x1xf32>
    %26 = vector.shape_cast %23 : vector<4x1xf32> to vector<1x4x1xf32>
    tpu.vector_store %arg6[%c0_17, %c0_18, %c0_19], %26 {strides = array<i32>} : memref<1x4x1xf32, #tpu.memory_space<vmem>>, vector<1x4x1xf32>,
    return
  }
  func.func @transform_0(%arg0: i32, %arg1: i32, %arg2: i32) -> (i32, i32, i32) {
    %c1_i32 = arith.constant 1 : i32
    %0 = arith.muli %arg0, %c1_i32 : i32
    %1 = arith.addi %0, %arg1 : i32
    %c0_i32 = arith.constant 0 : i32
    %c0_i32_0 = arith.constant 0 : i32
    return %1, %c0_i32, %arg2 : i32, i32, i32
  }
  func.func @transform_1(%arg0: i32, %arg1: i32, %arg2: i32) -> (i32, i32, i32) {
    %c1_i32 = arith.constant 1 : i32
    %0 = arith.muli %arg0, %c1_i32 : i32
    %1 = arith.addi %0, %arg1 : i32
    %c0_i32 = arith.constant 0 : i32
    %c0_i32_0 = arith.constant 0 : i32
    return %1, %c0_i32, %arg2 : i32, i32, i32
  }
  func.func @transform_2(%arg0: i32, %arg1: i32, %arg2: i32) -> (i32, i32, i32) {
    %c0_i32 = arith.constant 0 : i32
    %c0_i32_0 = arith.constant 0 : i32
    %c0_i32_1 = arith.constant 0 : i32
    return %arg0, %c0_i32, %c0_i32_0 : i32, i32, i32
  }
  func.func @transform_3(%arg0: i32, %arg1: i32, %arg2: i32) -> (i32, i32, i32) {
    %c0_i32 = arith.constant 0 : i32
    %c0_i32_0 = arith.constant 0 : i32
    %c0_i32_1 = arith.constant 0 : i32
    return %arg0, %c0_i32, %c0_i32_0 : i32, i32, i32
  }
}

</mosaic_0001>

<llo_original>
// kernel: dice_loss.1
$region0: #{dice_loss.1}
  #allocation0 [shape = 'u32[]', space=smem, size = 0x4, offset = 0x4, fixed_abs, tag = 'smem constant byte address 0x4 - core index']
  #allocation1 [shape = 'u32[72,128]{1,0:T(1,128)}', space=vmem, size = 0x9000, scoped, tag = 'internal scratch']
  %s0 = inlined_call_operand.vmem [shape: f32[2,4,256], index: 0, kind: input, shape index: {}]
  %s1 = inlined_call_operand.vmem [shape: f32[2,4,256], index: 1, kind: input, shape index: {}]
  %s2 = inlined_call_operand.vmem [shape: f32[2,4,1], index: 2, kind: output, shape index: {0}]
  %s3 = inlined_call_operand.vmem [shape: f32[2,4,1], index: 3, kind: output, shape index: {1}]
  %4 = xla_tuple %s2, %s3
  %s5 = sld [smem:[#allocation0]]
  $region53: #{dice_loss.1} parent=0
    _
  %s7 = ssub.s32 1, %s5
  %s8 = scalar_select 0, %s7, %s5
  loop: start=0, step=1, limit=4
  $region2: #{dice_loss.1} parent=0 // loop_pre_header
    _
  $region3: #{dice_loss.1} parent=0 // loop_header
    %s10 = sphi 0, %s14
    %p11 = scmp.ge.s32.totalorder %s10, 4
    %s17 = sphi 0, %s36
    %s18 = sphi 0, %s32
    %s19 = sphi 0, %s28
    %s20 = sphi 0, %s17
    %s21 = sphi 0, %s18
    %s22 = sphi 0, %s19
    %s23 = sphi 0, %s20
    %s24 = sphi 0, %s21
    %s25 = sphi 0, %s22
    %s43 = sphi 0, %s45
    %s46 = sphi 0, %s43
    %s47 = sphi 0, %s46
    %s63 = sphi 0, %s47
    %s73 = sphi 0, %s75
    %s76 = sphi 0, %s73
    %s77 = sphi 0, %s76
    %s93 = sphi 0, %s77
    %s99 = sphi 0, %s101
    %s102 = sphi 0, %s99
    %s103 = sphi 0, %s102
    %s119 = sphi 0, %s103
    %s125 = sphi 0, %s127
    %s128 = sphi 0, %s125
    %s129 = sphi 0, %s128
    %s145 = sphi 0, %s129
  $region4: #{dice_loss.1} parent=0 // loop_header_branch
    %13 = sbr.rel (%p11) target = $region8
  $region5: #{dice_loss.1} parent=0 // loop_body
    %s15 = ssub.s32 %s10, 1
    %s16 = ssub.s32 %s10, 2
    %s26 = sadd.s32 1, %s19
    %p27 = scmp.ge.s32.totalorder %s26, 1
    %s28 = scalar_select %p27, 0, %s26
    %s29 = sadd.s32 1, %s18
    %s30 = scalar_select %p27, %s29, %s18
    %p31 = scmp.ge.s32.totalorder %s30, 1
    %s32 = scalar_select %p31, 0, %s30
    %s33 = sadd.s32 1, %s17
    %s34 = scalar_select %p31, %s33, %s17
    %p35 = scmp.ge.s32.totalorder %s34, 2
    %s36 = scalar_select %p35, 0, %s34
    %s37 = sadd.s32 %s17, %s18
    %s38 = sadd.s32 %s36, %s32
    %s39 = ssub.s32 %s37, %s38
    %s40 = ssub.s32 %s19, %s28
    %s41 = sor.u32 %s39, %s40
    %p42 = scmp.eq.s32.totalorder %s41, 0
    %s44 = sadd.s32 %s43, 1
    %s45 = scalar_select %p42, %s43, %s44
    %p48 = pneg %p42
    %p49 = scmp.eq.s32.totalorder %s10, 1
    %p50 = por %p48, %p49
    %p51 = scmp.ne.s32.totalorder %s43, %s46
    %p52 = scmp.eq.s32.totalorder %s10, 0
    %p53 = por %p51, %p52
    %p54 = scmp.ne.s32.totalorder %s43, %s46
    %p55 = scmp.eq.s32.totalorder %s15, 1
    %p56 = por %p54, %p55
    %p57 = scmp.ne.s32.totalorder %s46, %s47
    %p58 = scmp.eq.s32.totalorder %s15, 0
    %p59 = por %p57, %p58
    %p60 = scmp.ne.s32.totalorder %s46, %s47
    %p61 = scmp.eq.s32.totalorder %s16, 1
    %p62 = por %p60, %p61
    %p64 = scmp.ne.s32.totalorder %s47, %s63
    %p65 = scmp.eq.s32.totalorder %s16, 0
    %p66 = por %p64, %p65
    %s67 = sadd.s32 %s17, %s18
    %s68 = sadd.s32 %s36, %s32
    %s69 = ssub.s32 %s67, %s68
    %s70 = ssub.s32 %s19, %s28
    %s71 = sor.u32 %s69, %s70
    %p72 = scmp.eq.s32.totalorder %s71, 0
    %s74 = sadd.s32 %s73, 1
    %s75 = scalar_select %p72, %s73, %s74
    %p78 = pneg %p72
    %p79 = scmp.eq.s32.totalorder %s10, 1
    %p80 = por %p78, %p79
    %p81 = scmp.ne.s32.totalorder %s73, %s76
    %p82 = scmp.eq.s32.totalorder %s10, 0
    %p83 = por %p81, %p82
    %p84 = scmp.ne.s32.totalorder %s73, %s76
    %p85 = scmp.eq.s32.totalorder %s15, 1
    %p86 = por %p84, %p85
    %p87 = scmp.ne.s32.totalorder %s76, %s77
    %p88 = scmp.eq.s32.totalorder %s15, 0
    %p89 = por %p87, %p88
    %p90 = scmp.ne.s32.totalorder %s76, %s77
    %p91 = scmp.eq.s32.totalorder %s16, 1
    %p92 = por %p90, %p91
    %p94 = scmp.ne.s32.totalorder %s77, %s93
    %p95 = scmp.eq.s32.totalorder %s16, 0
    %p96 = por %p94, %p95
    %s97 = ssub.s32 %s17, %s36
    %p98 = scmp.eq.s32.totalorder %s97, 0
    %s100 = sadd.s32 %s99, 1
    %s101 = scalar_select %p98, %s99, %s100
    %p104 = pneg %p98
    %p105 = scmp.eq.s32.totalorder %s10, 1
    %p106 = por %p104, %p105
    %p107 = scmp.ne.s32.totalorder %s99, %s102
    %p108 = scmp.eq.s32.totalorder %s10, 0
    %p109 = por %p107, %p108
    %p110 = scmp.ne.s32.totalorder %s99, %s102
    %p111 = scmp.eq.s32.totalorder %s15, 1
    %p112 = por %p110, %p111
    %p113 = scmp.ne.s32.totalorder %s102, %s103
    %p114 = scmp.eq.s32.totalorder %s15, 0
    %p115 = por %p113, %p114
    %p116 = scmp.ne.s32.totalorder %s102, %s103
    %p117 = scmp.eq.s32.totalorder %s16, 1
    %p118 = por %p116, %p117
    %p120 = scmp.ne.s32.totalorder %s103, %s119
    %p121 = scmp.eq.s32.totalorder %s16, 0
    %p122 = por %p120, %p121
    %s123 = ssub.s32 %s17, %s36
    %p124 = scmp.eq.s32.totalorder %s123, 0
    %s126 = sadd.s32 %s125, 1
    %s127 = scalar_select %p124, %s125, %s126
    %p130 = pneg %p124
    %p131 = scmp.eq.s32.totalorder %s10, 1
    %p132 = por %p130, %p131
    %p133 = scmp.ne.s32.totalorder %s125, %s128
    %p134 = scmp.eq.s32.totalorder %s10, 0
    %p135 = por %p133, %p134
    %p136 = scmp.ne.s32.totalorder %s125, %s128
    %p137 = scmp.eq.s32.totalorder %s15, 1
    %p138 = por %p136, %p137
    %p139 = scmp.ne.s32.totalorder %s128, %s129
    %p140 = scmp.eq.s32.totalorder %s15, 0
    %p141 = por %p139, %p140
    %p142 = scmp.ne.s32.totalorder %s128, %s129
    %p143 = scmp.eq.s32.totalorder %s16, 1
    %p144 = por %p142, %p143
    %p146 = scmp.ne.s32.totalorder %s129, %s145
    %p147 = scmp.eq.s32.totalorder %s16, 0
    %p148 = por %p146, %p147
    %p149 = scmp.le.s32.totalorder 1, %s10
    %p150 = scmp.lt.s32.totalorder %s10, 3
    %p151 = pnand %p149, %p150
    %p152 = pneg %p151
    // Predicated region
    $region9: #{dice_loss.1} parent=5 // pred_check
      _
    $region10: #{dice_loss.1} parent=5 // pred_check_branch
      %154 = sbr.rel (%p151) target = $region12
    $region11: #{dice_loss.1} parent=5 // pred_region
      %s155 = ssub.s32 %s10, 1
    $region12: #{dice_loss.1} parent=5 // pred_fallthru
      _
    %p156 = scmp.lt.s32.totalorder %s10, 2
    // Predicated region
    $region13: #{dice_loss.1} parent=5 // pred_check
      %p157 = pneg %p156
    $region14: #{dice_loss.1} parent=5 // pred_check_branch
      %159 = sbr.rel (%p157) target = $region16
    $region15: #{dice_loss.1} parent=5 // pred_region
      // Predicated region
      $region17: #{dice_loss.1} parent=15 // pred_check
        %p160 = pneg %p53
      $region18: #{dice_loss.1} parent=15 // pred_check_branch
        %162 = sbr.rel (%p160) target = $region20
      $region19: #{dice_loss.1} parent=15 // pred_region
        %s163 = sadd.s32 %s17, %s18
        %s164 = smul.u32 2, %s19
        %p165 = scmp.lt.s32.totalorder %s163, 1
        %s166 = scalar_select %p165, %s163, 1
        %p167 = scmp.lt.s32.totalorder %s164, 1
        %s168 = scalar_select %p167, %s164, 1
        %s169 = smul.addr %s166, 2
        %s170 = sadd.s32 %s168, %s169
        %s171 = smul.addr %s170, 4
        %s172 = scalar_lea.vmem %s0, %s171
        %s173 = sadd.s32 %s17, %s18
        %s174 = smul.u32 2, %s19
      $region20: #{dice_loss.1} parent=15 // pred_fallthru
        _
      // Predicated region
      $region21: #{dice_loss.1} parent=15 // pred_check
        %p175 = pneg %p83
      $region22: #{dice_loss.1} parent=15 // pred_check_branch
        %177 = sbr.rel (%p175) target = $region24
      $region23: #{dice_loss.1} parent=15 // pred_region
        %s178 = sadd.s32 %s17, %s18
        %s179 = smul.u32 2, %s19
        %p180 = scmp.lt.s32.totalorder %s178, 1
        %s181 = scalar_select %p180, %s178, 1
        %p182 = scmp.lt.s32.totalorder %s179, 1
        %s183 = scalar_select %p182, %s179, 1
        %s184 = smul.addr %s181, 2
        %s185 = sadd.s32 %s183, %s184
        %s186 = smul.addr %s185, 4
        %s187 = scalar_lea.vmem %s1, %s186
        %s188 = sadd.s32 %s17, %s18
        %s189 = smul.u32 2, %s19
      $region24: #{dice_loss.1} parent=15 // pred_fallthru
        _
    $region16: #{dice_loss.1} parent=5 // pred_fallthru
      _
    %p190 = scmp.le.s32.totalorder 1, %s10
    %p191 = scmp.lt.s32.totalorder %s10, 3
    %p192 = pnand %p190, %p191
    %p193 = pneg %p192
    // Predicated region
    $region25: #{dice_loss.1} parent=5 // pred_check
      _
    $region26: #{dice_loss.1} parent=5 // pred_check_branch
      %195 = sbr.rel (%p192) target = $region28
    $region27: #{dice_loss.1} parent=5 // pred_region
      %s196 = ssub.s32 %s10, 1
      %s197 = sadd.s32 %s20, %s21
      %s198 = smul.u32 2, %s22
      %p199 = scmp.lt.s32.totalorder %s197, 1
      %s200 = scalar_select %p199, %s197, 1
      %p201 = scmp.lt.s32.totalorder %s198, 1
      %s202 = scalar_select %p201, %s198, 1
      %s203 = smul.addr %s200, 2
      %s204 = sadd.s32 %s202, %s203
      %s205 = smul.addr %s204, 4
      %s206 = scalar_lea.vmem %s0, %s205
      %p207 = pneg %p59
      %p208 = pneg %p56
      %s209 = sadd.s32 %s20, %s21
      %s210 = smul.u32 2, %s22
      %p211 = scmp.lt.s32.totalorder %s209, 1
      %s212 = scalar_select %p211, %s209, 1
      %p213 = scmp.lt.s32.totalorder %s210, 1
      %s214 = scalar_select %p213, %s210, 1
      %s215 = smul.addr %s212, 2
      %s216 = sadd.s32 %s214, %s215
      %s217 = smul.addr %s216, 4
      %s218 = scalar_lea.vmem %s1, %s217
      %p219 = pneg %p89
      %p220 = pneg %p86
      %p221 = pneg %p115
      %p222 = pneg %p112
      %p223 = scmp.lt.s32.totalorder %s20, 1
      %s224 = scalar_select %p223, %s20, 1
      %s225 = smul.addr %s224, 4
      %s226 = scalar_lea.vmem %s2, %s225
      %p227 = pneg %p141
      %p228 = pneg %p138
      %p229 = scmp.lt.s32.totalorder %s20, 1
      %s230 = scalar_select %p229, %s20, 1
      %s231 = smul.addr %s230, 4
      %s232 = scalar_lea.vmem %s3, %s231
      %s233 = sadd.s32 %s20, %s21
      %s234 = smul.u32 2, %s22
      %p235 = scmp.lt.s32.totalorder %s233, 1
      %s236 = scalar_select %p235, %s233, 1
      %p237 = scmp.lt.s32.totalorder %s234, 1
      %s238 = scalar_select %p237, %s234, 1
      %s239 = smul.addr %s236, 2
      %s240 = sadd.s32 %s238, %s239
      %s241 = smul.addr %s240, 4
      %s242 = scalar_lea.vmem %s0, %s241
      %s243 = sadd.s32 %s20, %s21
      %s244 = smul.u32 2, %s22
      %s245 = sadd.s32 %s20, %s21
      %s246 = smul.u32 2, %s22
      %p247 = scmp.lt.s32.totalorder %s245, 1
      %s248 = scalar_select %p247, %s245, 1
      %p249 = scmp.lt.s32.totalorder %s246, 1
      %s250 = scalar_select %p249, %s246, 1
      %s251 = smul.addr %s248, 2
      %s252 = sadd.s32 %s250, %s251
      %s253 = smul.addr %s252, 4
      %s254 = scalar_lea.vmem %s1, %s253
      %s255 = sadd.s32 %s20, %s21
      %s256 = smul.u32 2, %s22
      %p257 = scmp.lt.s32.totalorder %s20, 1
      %s258 = scalar_select %p257, %s20, 1
      %s259 = smul.addr %s258, 4
      %s260 = scalar_lea.vmem %s2, %s259
      %p261 = scmp.lt.s32.totalorder %s20, 1
      %s262 = scalar_select %p261, %s20, 1
      %s263 = smul.addr %s262, 4
      %s264 = scalar_lea.vmem %s3, %s263
      %p265 = scmp.eq.s32.totalorder %s21, 0
      %p266 = scmp.eq.s32.totalorder %s22, 0
      %p267 = pnand %p265, %p266
      %p268 = pneg %p267
      // Predicated region
      $region29: #{dice_loss.1} parent=27 // pred_check
        _
      $region30: #{dice_loss.1} parent=27 // pred_check_branch
        %270 = sbr.rel (%p267) target = $region32
      $region31: #{dice_loss.1} parent=27 // pred_region
        %vm271 = vcmask 3072
        %272 = vst.msk [vmem:[%s260] sm:$0xf] %vm271, 0.0
        %273 = vst.msk [vmem:[%s264] sm:$0xf] %vm271, 0.0
      $region32: #{dice_loss.1} parent=27 // pred_fallthru
        _
      %v274 = vld [vmem:[%s242] sm:$0xff]
      %v275 = vld [vmem:[%s254] sm:$0xff]
      %v276 = vld [vmem:[%s260] sm:$0xf]
      %v277 = vmul.f32 %v274, %v275
      %279 = vst [vmem:[#allocation1] ss:$2 sm:$0xff] %v277
      %v280 = vld.sshfl [vmem:[#allocation1] sm:$0xff pattern:$0x75316420]
      %v281 = vld.sshfl [vmem:[#allocation1 + $0x8] sm:$0xff pattern:$0x75316420]
      %vm284 = vcmask 1043456
      %v285 = vsel %vm284, %v280, 0.0
      %v286 = vsel %vm284, %v281, 0.0
      %v287 = vadd.f32 %v285, %v286
      %288 = vadd.xlane.f32.xlu0 %v287
      %v289 = vpop.xlane.xlu0 %288
      %v290 = vadd.f32 %v276, %v289
      %vm291 = vcmask 3072
      %292 = vst.msk [vmem:[%s260] sm:$0xf] %vm291, %v290
      %v293 = vld [vmem:[%s264] sm:$0xf]
      %v294 = vadd.f32 %v274, %v275
      %296 = vst [vmem:[#allocation1] ss:$2 sm:$0xff] %v294
      %v297 = vld.sshfl [vmem:[#allocation1] sm:$0xff pattern:$0x75316420]
      %v298 = vld.sshfl [vmem:[#allocation1 + $0x8] sm:$0xff pattern:$0x75316420]
      %v301 = vsel %vm284, %v297, 0.0
      %v302 = vsel %vm284, %v298, 0.0
      %v303 = vadd.f32 %v301, %v302
      %304 = vadd.xlane.f32.xlu0 %v303
      %v305 = vpop.xlane.xlu0 %304
      %v306 = vadd.f32 %v293, %v305
      %307 = vst.msk [vmem:[%s264] sm:$0xf] %vm291, %v306
      %p308 = scmp.lt.s32.totalorder %s20, 1
      %s309 = scalar_select %p308, %s20, 1
      %s310 = smul.addr %s309, 4
      %s311 = scalar_lea.vmem %s2, %s310
      %p312 = scmp.lt.s32.totalorder %s20, 1
      %s313 = scalar_select %p312, %s20, 1
      %s314 = smul.addr %s313, 4
      %s315 = scalar_lea.vmem %s3, %s314
      // Predicated region
      $region33: #{dice_loss.1} parent=27 // pred_check
        %p316 = pneg %p112
      $region34: #{dice_loss.1} parent=27 // pred_check_branch
        %318 = sbr.rel (%p316) target = $region36
      $region35: #{dice_loss.1} parent=27 // pred_region
        _
      $region36: #{dice_loss.1} parent=27 // pred_fallthru
        _
      // Predicated region
      $region37: #{dice_loss.1} parent=27 // pred_check
        %p319 = pneg %p138
      $region38: #{dice_loss.1} parent=27 // pred_check_branch
        %321 = sbr.rel (%p319) target = $region40
      $region39: #{dice_loss.1} parent=27 // pred_region
        _
      $region40: #{dice_loss.1} parent=27 // pred_fallthru
        _
    $region28: #{dice_loss.1} parent=5 // pred_fallthru
      _
    %p322 = scmp.le.s32.totalorder 2, %s10
    // Predicated region
    $region41: #{dice_loss.1} parent=5 // pred_check
      %p323 = pneg %p322
    $region42: #{dice_loss.1} parent=5 // pred_check_branch
      %325 = sbr.rel (%p323) target = $region44
    $region43: #{dice_loss.1} parent=5 // pred_region
      %s326 = ssub.s32 %s10, 2
      // Predicated region
      $region45: #{dice_loss.1} parent=43 // pred_check
        %p327 = pneg %p118
      $region46: #{dice_loss.1} parent=43 // pred_check_branch
        %329 = sbr.rel (%p327) target = $region48
      $region47: #{dice_loss.1} parent=43 // pred_region
        %p330 = scmp.lt.s32.totalorder %s23, 1
        %s331 = scalar_select %p330, %s23, 1
        %s332 = smul.addr %s331, 4
        %s333 = scalar_lea.vmem %s2, %s332
      $region48: #{dice_loss.1} parent=43 // pred_fallthru
        _
      // Predicated region
      $region49: #{dice_loss.1} parent=43 // pred_check
        %p334 = pneg %p144
      $region50: #{dice_loss.1} parent=43 // pred_check_branch
        %336 = sbr.rel (%p334) target = $region52
      $region51: #{dice_loss.1} parent=43 // pred_region
        %p337 = scmp.lt.s32.totalorder %s23, 1
        %s338 = scalar_select %p337, %s23, 1
        %s339 = smul.addr %s338, 4
        %s340 = scalar_lea.vmem %s3, %s339
      $region52: #{dice_loss.1} parent=43 // pred_fallthru
        _
    $region44: #{dice_loss.1} parent=5 // pred_fallthru
      _
  $region6: #{dice_loss.1} parent=0 // loop_footer
    %s14 = sadd.s32 1, %s10
  $region7: #{dice_loss.1} parent=0 // loop_footer_branch
    %9 = sbr.rel target = $region3
  $region8: #{dice_loss.1} parent=0 // loop_exit
    _

</llo_original>
